<compile_context>
chip_gen: v7x
topology: tpu7x:2x2x1
jax: 0.10.0
libtpu: 0.0.40
codegen_flags: <defaults>
</compile_context>

<pallas_src>
import jax
import jax.numpy as jnp
from jax.experimental import pallas as pl
from jax.experimental.pallas import tpu as pltpu

LANE = 128
H = 3  # hidden width (see TODO above)


def model_kernel(w_ref, x_ref, out_ref):
    """One lane-dense row tile of the whole forward pass.

    w_ref : SMEM f32[16]  packed (pre-folded) as
            [0:3]   a_s = 0.5*ws1   (s-branch tanh-arg scale)
            [3:6]   c_s = 0.5*bs1   (s-branch tanh-arg offset)
            [6:9]   a_n = 0.5*wn1   (n-branch tanh-arg scale)
            [9:12]  c_n = 0.5*bn1   (n-branch tanh-arg offset)
            [12:15] d   = 0.5*wp    (shared output weight)
            [15]    acc0 = bp + 0.5*sum(wp)
    x_ref / out_ref : VMEM f32[tile_rows, 128]
    """
    x = x_ref[...]                       # (tile_rows, 128), full vreg utilization
    acc0 = w_ref[15]
    d0 = w_ref[12]

    # Statically unrolled 3-term scalar-weight chains (pure VPU + EUP).
    # sigmoid(x*w+b)*wp == tanh(x*a + c)*d + d, with all the +d constants and
    # the output bias pre-summed into acc0 (wrapper-side fold).
    v1s = jnp.tanh(x * w_ref[0] + w_ref[3]) * d0 + acc0
    vn = jnp.tanh(x * w_ref[6] + w_ref[9]) * d0 + acc0
    for k in range(1, H):
        dk = w_ref[12 + k]
        v1s = v1s + jnp.tanh(x * w_ref[k] + w_ref[3 + k]) * dk
        vn = vn + jnp.tanh(x * w_ref[6 + k] + w_ref[9 + k]) * dk

    # v2s = v1n = v2n = vn, so
    # v1s*v2s + v1s*v2n + v1n*v2s + v1n*v2n == 2*vn*(v1s + vn)
    out_ref[...] = 2.0 * vn * (v1s + vn)


def model_forward(x, ws1, bs1, wn1, bn1, wp_row, bp, *, tile_rows=1024):
    """x: (N, 1) f32.  Weights stored (in, out) vs PyTorch's (out, in)."""
    n = x.shape[0]

    ws1f = ws1.reshape(-1).astype(jnp.float32)
    bs1f = bs1.reshape(-1).astype(jnp.float32)
    wn1f = wn1.reshape(-1).astype(jnp.float32)
    bn1f = bn1.reshape(-1).astype(jnp.float32)
    wpf = wp_row.reshape(-1).astype(jnp.float32)
    bpf = bp.reshape(-1).astype(jnp.float32)

    # Pre-folded 16-scalar pack for SMEM scalar prefetch (see kernel docstring).
    w = jnp.concatenate(
        [0.5 * ws1f, 0.5 * bs1f,                       # s-branch a_k, c_k
         0.5 * wn1f, 0.5 * bn1f,                       # n-branch a_k, c_k
         0.5 * wpf,                                    # shared d_k
         bpf + 0.5 * jnp.sum(wpf, keepdims=True)]      # acc0
    ).astype(jnp.float32)                              # (16,)

    rows = -(-n // LANE)

    # Tile selection: multiple of 8 sublanes; keep >=2 grid steps when rows
    # allow it so megacore (v7x, 2 TCs) can shard the "parallel" axis.
    tr = max(8, (min(tile_rows, rows) // 8) * 8)
    if rows >= 16 and -(-rows // tr) < 2:
        tr = max(8, ((-(-rows // 2)) + 7) // 8 * 8)
    grid = (-(-rows // tr),)

    # Lane-dense layout with minimal wrapper traffic:
    #   * N % 128 == 0  -> plain reshape, zero extra HBM copies.
    #   * otherwise     -> pad only up to rows*128; the ragged last grid block
    #                      is handled by Pallas OOB masking (reads padded,
    #                      writes discarded).
    aligned = (n == rows * LANE)
    if aligned:
        x2d = x.reshape(rows, LANE)
    else:
        x2d = jnp.pad(x.reshape(-1), (0, rows * LANE - n)).reshape(rows, LANE)

    out2d = pl.pallas_call(
        model_kernel,
        out_shape=jax.ShapeDtypeStruct((rows, LANE), jnp.float32),
        grid_spec=pltpu.PrefetchScalarGridSpec(
            num_scalar_prefetch=1,
            grid=grid,
            in_specs=[pl.BlockSpec((tr, LANE), lambda i, w_ref: (i, 0))],
            out_specs=pl.BlockSpec((tr, LANE), lambda i, w_ref: (i, 0)),
        ),
        compiler_params=pltpu.CompilerParams(
            dimension_semantics=("parallel",)),
        cost_estimate=pl.CostEstimate(
            flops=30 * rows * LANE,
            transcendentals=6 * rows * LANE,
            bytes_accessed=8 * rows * LANE),
    )(w, x2d)

    if aligned:
        return out2d.reshape(n, 1)
    # NOTE: padded-lane outputs are finite garbage (bias-only); this slice
    # removes them.  Anyone dropping the slice must mask the tail.
    return out2d.reshape(-1)[:n].reshape(n, 1)


def reference_forward(x, ws1, bs1, wn1, bn1, wp_row, bp):
    hs = jax.nn.sigmoid(x @ ws1 + bs1)
    v1s = jnp.sum(hs * wp_row, axis=-1, keepdims=True) + bp
    hn = jax.nn.sigmoid(x @ wn1 + bn1)
    vn = jnp.sum(hn * wp_row, axis=-1, keepdims=True) + bp
    v2s = v1n = v2n = vn
    return v1s * v2s + v1s * v2n + v1n * v2s + v1n * v2n


if __name__ == "__main__":
    key = jax.random.PRNGKey(0)
    k_x, k_ws1, k_bs1, k_wn1, k_bn1, k_wp, k_bp = jax.random.split(key, 7)

    # PyTorch-style uniform(-1/sqrt(fan_in), 1/sqrt(fan_in)) init, deterministic.
    def uinit(k, shape, fan_in):
        b = 1.0 / jnp.sqrt(jnp.float32(fan_in))
        return jax.random.uniform(k, shape, jnp.float32, -b, b)

    ws1 = uinit(k_ws1, (1, H), 1)      # Linear(1,3) weight, stored (in, out)
    bs1 = uinit(k_bs1, (1, H), 1)      # bias as row
    wn1 = uinit(k_wn1, (1, H), 1)      # Linear(1,3) weight
    bn1 = uinit(k_bn1, (1, H), 1)
    wp_row = uinit(k_wp, (1, H), H)    # Linear(3,1) weight, stored as row (1, 3)
    bp = uinit(k_bp, (1, 1), H)        # scalar bias as (1,1)

    # Two small cases: 128-aligned (no pad / no slice) and ragged (pad + masked
    # last grid block + output slice).  Default tile_rows (no tiny-tile runs).
    for N in (2048, 2043):
        xk = jax.random.fold_in(k_x, N)
        x = jax.random.normal(xk, (N, 1), dtype=jnp.float32)

        out = model_forward(x, ws1, bs1, wn1, bn1, wp_row, bp)
        out = jax.block_until_ready(out)

        ref = reference_forward(x, ws1, bs1, wn1, bn1, wp_row, bp)
        assert out.shape == (N, 1)
        assert jnp.allclose(out, ref, atol=1e-5, rtol=1e-5), (N, out, ref)

    print("KERNEL_OK")
</pallas_src>

<mosaic_0001>
module attributes {stable_mosaic.version = 11 : i64} {
  func.func @model_kernel(%arg0: i32, %arg1: memref<16xf32, #tpu.memory_space<smem>>, %arg2: memref<8x128xf32, #tpu.memory_space<vmem>>, %arg3: memref<8x128xf32, #tpu.memory_space<vmem>>) attributes {dimension_semantics = [#tpu.dimension_semantics<parallel>], iteration_bounds = array<i64: 2>, scalar_prefetch = 1 : i64, scratch_operands = 0 : i64, tpu.core_type = #tpu.core_type<tc>, window_params = [{transform_indices = @transform_0, window_bounds = array<i64: 8, 128>}, {transform_indices = @transform_1, window_bounds = array<i64: 8, 128>}]} {
    %c0 = arith.constant 0 : index
    %c0_0 = arith.constant 0 : index
    %0 = vector.load %arg2[%c0, %c0_0] : memref<8x128xf32, #tpu.memory_space<vmem>>, vector<8x128xf32>
    %c15 = arith.constant 15 : index
    %1 = memref.load %arg1[%c15] : memref<16xf32, #tpu.memory_space<smem>>
    %c12 = arith.constant 12 : index
    %2 = memref.load %arg1[%c12] : memref<16xf32, #tpu.memory_space<smem>>
    %c0_1 = arith.constant 0 : index
    %3 = memref.load %arg1[%c0_1] : memref<16xf32, #tpu.memory_space<smem>>
    %4 = vector.broadcast %3 : f32 to vector<8x128xf32>
    %5 = arith.mulf %0, %4 : vector<8x128xf32>
    %c3 = arith.constant 3 : index
    %6 = memref.load %arg1[%c3] : memref<16xf32, #tpu.memory_space<smem>>
    %7 = vector.broadcast %6 : f32 to vector<8x128xf32>
    %8 = arith.addf %5, %7 : vector<8x128xf32>
    %9 = math.tanh %8 : vector<8x128xf32>
    %10 = vector.broadcast %2 : f32 to vector<8x128xf32>
    %11 = arith.mulf %9, %10 : vector<8x128xf32>
    %12 = vector.broadcast %1 : f32 to vector<8x128xf32>
    %13 = arith.addf %11, %12 : vector<8x128xf32>
    %c6 = arith.constant 6 : index
    %14 = memref.load %arg1[%c6] : memref<16xf32, #tpu.memory_space<smem>>
    %15 = vector.broadcast %14 : f32 to vector<8x128xf32>
    %16 = arith.mulf %0, %15 : vector<8x128xf32>
    %c9 = arith.constant 9 : index
    %17 = memref.load %arg1[%c9] : memref<16xf32, #tpu.memory_space<smem>>
    %18 = vector.broadcast %17 : f32 to vector<8x128xf32>
    %19 = arith.addf %16, %18 : vector<8x128xf32>
    %20 = math.tanh %19 : vector<8x128xf32>
    %21 = vector.broadcast %2 : f32 to vector<8x128xf32>
    %22 = arith.mulf %20, %21 : vector<8x128xf32>
    %23 = vector.broadcast %1 : f32 to vector<8x128xf32>
    %24 = arith.addf %22, %23 : vector<8x128xf32>
    %c13 = arith.constant 13 : index
    %25 = memref.load %arg1[%c13] : memref<16xf32, #tpu.memory_space<smem>>
    %c1 = arith.constant 1 : index
    %26 = memref.load %arg1[%c1] : memref<16xf32, #tpu.memory_space<smem>>
    %27 = vector.broadcast %26 : f32 to vector<8x128xf32>
    %28 = arith.mulf %0, %27 : vector<8x128xf32>
    %c4 = arith.constant 4 : index
    %29 = memref.load %arg1[%c4] : memref<16xf32, #tpu.memory_space<smem>>
    %30 = vector.broadcast %29 : f32 to vector<8x128xf32>
    %31 = arith.addf %28, %30 : vector<8x128xf32>
    %32 = math.tanh %31 : vector<8x128xf32>
    %33 = vector.broadcast %25 : f32 to vector<8x128xf32>
    %34 = arith.mulf %32, %33 : vector<8x128xf32>
    %35 = arith.addf %13, %34 : vector<8x128xf32>
    %c7 = arith.constant 7 : index
    %36 = memref.load %arg1[%c7] : memref<16xf32, #tpu.memory_space<smem>>
    %37 = vector.broadcast %36 : f32 to vector<8x128xf32>
    %38 = arith.mulf %0, %37 : vector<8x128xf32>
    %c10 = arith.constant 10 : index
    %39 = memref.load %arg1[%c10] : memref<16xf32, #tpu.memory_space<smem>>
    %40 = vector.broadcast %39 : f32 to vector<8x128xf32>
    %41 = arith.addf %38, %40 : vector<8x128xf32>
    %42 = math.tanh %41 : vector<8x128xf32>
    %43 = vector.broadcast %25 : f32 to vector<8x128xf32>
    %44 = arith.mulf %42, %43 : vector<8x128xf32>
    %45 = arith.addf %24, %44 : vector<8x128xf32>
    %c14 = arith.constant 14 : index
    %46 = memref.load %arg1[%c14] : memref<16xf32, #tpu.memory_space<smem>>
    %c2 = arith.constant 2 : index
    %47 = memref.load %arg1[%c2] : memref<16xf32, #tpu.memory_space<smem>>
    %48 = vector.broadcast %47 : f32 to vector<8x128xf32>
    %49 = arith.mulf %0, %48 : vector<8x128xf32>
    %c5 = arith.constant 5 : index
    %50 = memref.load %arg1[%c5] : memref<16xf32, #tpu.memory_space<smem>>
    %51 = vector.broadcast %50 : f32 to vector<8x128xf32>
    %52 = arith.addf %49, %51 : vector<8x128xf32>
    %53 = math.tanh %52 : vector<8x128xf32>
    %54 = vector.broadcast %46 : f32 to vector<8x128xf32>
    %55 = arith.mulf %53, %54 : vector<8x128xf32>
    %56 = arith.addf %35, %55 : vector<8x128xf32>
    %c8 = arith.constant 8 : index
    %57 = memref.load %arg1[%c8] : memref<16xf32, #tpu.memory_space<smem>>
    %58 = vector.broadcast %57 : f32 to vector<8x128xf32>
    %59 = arith.mulf %0, %58 : vector<8x128xf32>
    %c11 = arith.constant 11 : index
    %60 = memref.load %arg1[%c11] : memref<16xf32, #tpu.memory_space<smem>>
    %61 = vector.broadcast %60 : f32 to vector<8x128xf32>
    %62 = arith.addf %59, %61 : vector<8x128xf32>
    %63 = math.tanh %62 : vector<8x128xf32>
    %64 = vector.broadcast %46 : f32 to vector<8x128xf32>
    %65 = arith.mulf %63, %64 : vector<8x128xf32>
    %66 = arith.addf %45, %65 : vector<8x128xf32>
    %cst = arith.constant 2.000000e+00 : f32
    %67 = vector.broadcast %cst : f32 to vector<8x128xf32>
    %68 = arith.mulf %67, %66 : vector<8x128xf32>
    %69 = arith.addf %56, %66 : vector<8x128xf32>
    %70 = arith.mulf %68, %69 : vector<8x128xf32>
    %c0_2 = arith.constant 0 : index
    %c0_3 = arith.constant 0 : index
    %71 = vector.load %arg3[%c0_2, %c0_3] : memref<8x128xf32, #tpu.memory_space<vmem>>, vector<8x128xf32>
    tpu.vector_store %arg3[%c0_2, %c0_3], %70 {strides = array<i32>} : memref<8x128xf32, #tpu.memory_space<vmem>>, vector<8x128xf32>,
    return
  }
  func.func @transform_0(%arg0: i32, %arg1: memref<16xf32, #tpu.memory_space<smem>>) -> (i32, i32) {
    %c0_i32 = arith.constant 0 : i32
    %c0_i32_0 = arith.constant 0 : i32
    return %arg0, %c0_i32 : i32, i32
  }
  func.func @transform_1(%arg0: i32, %arg1: memref<16xf32, #tpu.memory_space<smem>>) -> (i32, i32) {
    %c0_i32 = arith.constant 0 : i32
    %c0_i32_0 = arith.constant 0 : i32
    return %arg0, %c0_i32 : i32, i32
  }
}

</mosaic_0001>

<llo_original>
// kernel: tpu_custom_call.1
$region0: #{tpu_custom_call.1}
  #allocation0 [shape = 'u32[]', space=smem, size = 0x4, offset = 0x4, fixed_abs, tag = 'smem constant byte address 0x4 - core index']
  #allocation1 [shape = 'u32[144,128]{1,0:T(1,128)}', space=vmem, size = 0x12000, scoped, tag = 'internal scratch']
  #allocation2 [shape = 's32[1]{0}', space=sflag, size = 0x4, scoped, tag = 'scoped memory for tpu_custom_call.1']
  #allocation3 [shape = 'u8[512]{0}', space=smem, size = 0x200, scoped, tag = 'prefetched SMEM operand 0']
  %s0 = inlined_call_operand.hbm [shape: f32[16], index: 0, kind: input, shape index: {}]
  %s1 = inlined_call_operand.hbm [shape: f32[16,128], index: 1, kind: input, shape index: {}]
  %s2 = inlined_call_operand.hbm [shape: f32[16,128], index: 2, kind: output, shape index: {}]
  %s3 = sld [smem:[#allocation0]]
  $region41: #{tpu_custom_call.1} parent=0
    _
  %s5 = ssub.s32 1, %s3
  %s6 = scalar_select 0, %s5, %s3
  %8 = dma.hbm_to_smem %s0, 16, [#allocation3], [#allocation2]
  %9 = dma.done [#allocation2], 16
  %10 = sfence
  $region1: #{tpu_custom_call.1} parent=0
    #allocation4 [shape = 'u8[8192]{0}', space=vmem, size = 0x2000, scoped, tag = 'input window, operand 1']
    #allocation5 [shape = 's32[2]{0}', space=sflag, size = 0x8, scoped, tag = 'scoped memory for tpu_custom_call.1']
    #allocation6 [shape = 's32[2]{0}', space=sflag, size = 0x8, scoped, tag = 'scoped memory for tpu_custom_call.1']
    #allocation7 [shape = 'u8[8192]{0}', space=vmem, size = 0x2000, scoped, tag = 'output window, operand 0']
    %11 = vsyncpa [#allocation5], 0
    %s12 = scalar_lea.sflag [#allocation5], 1
    %13 = vsyncpa %s12, 0
    %14 = vsyncpa [#allocation6], 0
    %s15 = scalar_lea.sflag [#allocation6], 1
    %16 = vsyncpa %s15, 0
    loop: start=0, step=1, limit=4
    $region2: #{tpu_custom_call.1} parent=1 // loop_pre_header
      _
    $region3: #{tpu_custom_call.1} parent=1 // loop_header
      %s18 = sphi 0, %s22
      %p19 = scmp.ge.s32.totalorder %s18, 4
      %s28 = sphi 0, %s30
      %s31 = sphi 0, %s28
      %s32 = sphi 0, %s31
      %s48 = sphi 0, %s32
      %s54 = sphi 0, %s56
      %s57 = sphi 0, %s54
      %s58 = sphi 0, %s57
      %s74 = sphi 0, %s58
    $region4: #{tpu_custom_call.1} parent=1 // loop_header_branch
      %21 = sbr.rel (%p19) target = $region8
    $region5: #{tpu_custom_call.1} parent=1 // loop_body
      %s23 = ssub.s32 %s18, 1
      %s24 = ssub.s32 %s18, 2
      %s25 = sadd.s32 %s18, 1
      %s26 = ssub.s32 %s18, %s25
      %p27 = scmp.eq.s32.totalorder %s26, 0
      %s29 = sadd.s32 %s28, 1
      %s30 = scalar_select %p27, %s28, %s29
      %p33 = pneg %p27
      %p34 = scmp.eq.s32.totalorder %s18, 1
      %p35 = por %p33, %p34
      %p36 = scmp.ne.s32.totalorder %s28, %s31
      %p37 = scmp.eq.s32.totalorder %s18, 0
      %p38 = por %p36, %p37
      %p39 = scmp.ne.s32.totalorder %s28, %s31
      %p40 = scmp.eq.s32.totalorder %s23, 1
      %p41 = por %p39, %p40
      %p42 = scmp.ne.s32.totalorder %s31, %s32
      %p43 = scmp.eq.s32.totalorder %s23, 0
      %p44 = por %p42, %p43
      %p45 = scmp.ne.s32.totalorder %s31, %s32
      %p46 = scmp.eq.s32.totalorder %s24, 1
      %p47 = por %p45, %p46
      %p49 = scmp.ne.s32.totalorder %s32, %s48
      %p50 = scmp.eq.s32.totalorder %s24, 0
      %p51 = por %p49, %p50
      %s52 = ssub.s32 %s18, %s25
      %p53 = scmp.eq.s32.totalorder %s52, 0
      %s55 = sadd.s32 %s54, 1
      %s56 = scalar_select %p53, %s54, %s55
      %p59 = pneg %p53
      %p60 = scmp.eq.s32.totalorder %s18, 1
      %p61 = por %p59, %p60
      %p62 = scmp.ne.s32.totalorder %s54, %s57
      %p63 = scmp.eq.s32.totalorder %s18, 0
      %p64 = por %p62, %p63
      %p65 = scmp.ne.s32.totalorder %s54, %s57
      %p66 = scmp.eq.s32.totalorder %s23, 1
      %p67 = por %p65, %p66
      %p68 = scmp.ne.s32.totalorder %s57, %s58
      %p69 = scmp.eq.s32.totalorder %s23, 0
      %p70 = por %p68, %p69
      %p71 = scmp.ne.s32.totalorder %s57, %s58
      %p72 = scmp.eq.s32.totalorder %s24, 1
      %p73 = por %p71, %p72
      %p75 = scmp.ne.s32.totalorder %s58, %s74
      %p76 = scmp.eq.s32.totalorder %s24, 0
      %p77 = por %p75, %p76
      %p78 = scmp.le.s32.totalorder 1, %s18
      %p79 = scmp.lt.s32.totalorder %s18, 3
      %p80 = pnand %p78, %p79
      %p81 = pneg %p80
      // Predicated region
      $region9: #{tpu_custom_call.1} parent=5 // pred_check
        _
      $region10: #{tpu_custom_call.1} parent=5 // pred_check_branch
        %83 = sbr.rel (%p80) target = $region12
      $region11: #{tpu_custom_call.1} parent=5 // pred_region
        %s84 = ssub.s32 %s18, 1
      $region12: #{tpu_custom_call.1} parent=5 // pred_fallthru
        _
      %p85 = scmp.lt.s32.totalorder %s18, 2
      // Predicated region
      $region13: #{tpu_custom_call.1} parent=5 // pred_check
        %p86 = pneg %p85
      $region14: #{tpu_custom_call.1} parent=5 // pred_check_branch
        %88 = sbr.rel (%p86) target = $region16
      $region15: #{tpu_custom_call.1} parent=5 // pred_region
        // Predicated region
        $region17: #{tpu_custom_call.1} parent=15 // pred_check
          %p89 = pneg %p38
        $region18: #{tpu_custom_call.1} parent=15 // pred_check_branch
          %91 = sbr.rel (%p89) target = $region20
        $region19: #{tpu_custom_call.1} parent=15 // pred_region
          %s92 = sand.u32 %s28, 1
          %s93 = scalar_lea.sflag [#allocation5], %s92
          %s94 = sand.u32 %s28, 1
          %s95 = smul.addr %s94, 8
          %s96 = scalar_lea.vmem [#allocation4], %s95
          %s98 = ssub.s32 128, 128
          %99 = vsyncadd %s93, %s98
          %s100 = smul.addr %s18, 128
          %s101 = scalar_lea.hbm %s1, %s100
          %s103 = sshll.u32 %s96, 4
          %s104 = int_to_ptr.vmem [resolvable:$true] %s103
          %106 = dma.hbm_to_vmem [thread:$0]  %s101, 128, %s104, %s93
        $region20: #{tpu_custom_call.1} parent=15 // pred_fallthru
          _
      $region16: #{tpu_custom_call.1} parent=5 // pred_fallthru
        _
      %p107 = scmp.le.s32.totalorder 1, %s18
      %p108 = scmp.lt.s32.totalorder %s18, 3
      %p109 = pnand %p107, %p108
      %p110 = pneg %p109
      // Predicated region
      $region21: #{tpu_custom_call.1} parent=5 // pred_check
        _
      $region22: #{tpu_custom_call.1} parent=5 // pred_check_branch
        %112 = sbr.rel (%p109) target = $region24
      $region23: #{tpu_custom_call.1} parent=5 // pred_region
        %s113 = ssub.s32 %s18, 1
        %s114 = sand.u32 %s31, 1
        %s115 = scalar_lea.sflag [#allocation5], %s114
        %s116 = sand.u32 %s31, 1
        %s117 = smul.addr %s116, 8
        %s118 = scalar_lea.vmem [#allocation4], %s117
        // Predicated region
        $region25: #{tpu_custom_call.1} parent=23 // pred_check
          %p119 = pneg %p44
        $region26: #{tpu_custom_call.1} parent=23 // pred_check_branch
          %121 = sbr.rel (%p119) target = $region28
        $region27: #{tpu_custom_call.1} parent=23 // pred_region
          %122 = dma.done %s115, 128
        $region28: #{tpu_custom_call.1} parent=23 // pred_fallthru
          _
        %s123 = sand.u32 %s31, 1
        %s124 = scalar_lea.sflag [#allocation5], %s123
        %s125 = sand.u32 %s31, 1
        %s126 = smul.addr %s125, 8
        %s127 = scalar_lea.vmem [#allocation4], %s126
        %p128 = pneg %p44
        %p129 = pneg %p41
        %p130 = pneg %p70
        %p131 = pneg %p67
        %s132 = sand.u32 %s57, 1
        %s133 = scalar_lea.sflag [#allocation6], %s132
        %s134 = sand.u32 %s57, 1
        %s135 = smul.addr %s134, 8
        %s136 = scalar_lea.vmem [#allocation7], %s135
        %v137 = vld [vmem:[%s118] sm:$0xff]
        %s138 = sld [smem:[#allocation3 + $0xf]]
        %s139 = sld [smem:[#allocation3 + $0xc]]
        %s140 = sld [smem:[#allocation3]]
        %v141 = vstv %s140
        %v142 = vmul.f32 %v137, %v141
        %s143 = sld [smem:[#allocation3 + $0x3]]
        %v144 = vstv %s143
        %v145 = vadd.f32 %v142, %v144
        %v146 = vtanh.pop %v145
        %v147 = vstv %s139
        %v148 = vmul.f32 %v146, %v147
        %v149 = vstv %s138
        %v150 = vadd.f32 %v148, %v149
        %s151 = sld [smem:[#allocation3 + $0x6]]
        %v152 = vstv %s151
        %v153 = vmul.f32 %v137, %v152
        %s154 = sld [smem:[#allocation3 + $0x9]]
        %v155 = vstv %s154
        %v156 = vadd.f32 %v153, %v155
        %v157 = vtanh.pop %v156
        %v158 = vmul.f32 %v157, %v147
        %v159 = vadd.f32 %v158, %v149
        %s160 = sld [smem:[#allocation3 + $0xd]]
        %s161 = sld [smem:[#allocation3 + $0x1]]
        %v162 = vstv %s161
        %v163 = vmul.f32 %v137, %v162
        %s164 = sld [smem:[#allocation3 + $0x4]]
        %v165 = vstv %s164
        %v166 = vadd.f32 %v163, %v165
        %v167 = vtanh.pop %v166
        %v168 = vstv %s160
        %v169 = vmul.f32 %v167, %v168
        %v170 = vadd.f32 %v150, %v169
        %s171 = sld [smem:[#allocation3 + $0x7]]
        %v172 = vstv %s171
        %v173 = vmul.f32 %v137, %v172
        %s174 = sld [smem:[#allocation3 + $0xa]]
        %v175 = vstv %s174
        %v176 = vadd.f32 %v173, %v175
        %v177 = vtanh.pop %v176
        %v178 = vmul.f32 %v177, %v168
        %v179 = vadd.f32 %v159, %v178
        %s180 = sld [smem:[#allocation3 + $0xe]]
        %s181 = sld [smem:[#allocation3 + $0x2]]
        %v182 = vstv %s181
        %v183 = vmul.f32 %v137, %v182
        %s184 = sld [smem:[#allocation3 + $0x5]]
        %v185 = vstv %s184
        %v186 = vadd.f32 %v183, %v185
        %v187 = vtanh.pop %v186
        %v188 = vstv %s180
        %v189 = vmul.f32 %v187, %v188
        %v190 = vadd.f32 %v170, %v189
        %s191 = sld [smem:[#allocation3 + $0x8]]
        %v192 = vstv %s191
        %v193 = vmul.f32 %v137, %v192
        %s194 = sld [smem:[#allocation3 + $0xb]]
        %v195 = vstv %s194
        %v196 = vadd.f32 %v193, %v195
        %v197 = vtanh.pop %v196
        %v198 = vmul.f32 %v197, %v188
        %v199 = vadd.f32 %v179, %v198
        %v200 = vmul.f32 %v199, 2.0
        %v201 = vadd.f32 %v190, %v199
        %v202 = vmul.f32 %v200, %v201
        %203 = vst [vmem:[%s136] sm:$0xff] %v202
        %s204 = sand.u32 %s57, 1
        %s205 = scalar_lea.sflag [#allocation6], %s204
        %s206 = sand.u32 %s57, 1
        %s207 = smul.addr %s206, 8
        %s208 = scalar_lea.vmem [#allocation7], %s207
        // Predicated region
        $region29: #{tpu_custom_call.1} parent=23 // pred_check
          %p209 = pneg %p67
        $region30: #{tpu_custom_call.1} parent=23 // pred_check_branch
          %211 = sbr.rel (%p209) target = $region32
        $region31: #{tpu_custom_call.1} parent=23 // pred_region
          %s213 = ssub.s32 128, 128
          %214 = vsyncadd %s205, %s213
          %s215 = smul.addr %s23, 128
          %s216 = scalar_lea.hbm %s2, %s215
          %s218 = sshll.u32 %s208, 4
          %s219 = int_to_ptr.vmem [resolvable:$true] %s218
          %221 = dma.vmem_to_hbm [thread:$0]  %s219, 128, %s216, %s205
        $region32: #{tpu_custom_call.1} parent=23 // pred_fallthru
          _
      $region24: #{tpu_custom_call.1} parent=5 // pred_fallthru
        _
      %p222 = scmp.le.s32.totalorder 2, %s18
      // Predicated region
      $region33: #{tpu_custom_call.1} parent=5 // pred_check
        %p223 = pneg %p222
      $region34: #{tpu_custom_call.1} parent=5 // pred_check_branch
        %225 = sbr.rel (%p223) target = $region36
      $region35: #{tpu_custom_call.1} parent=5 // pred_region
        %s226 = ssub.s32 %s18, 2
        // Predicated region
        $region37: #{tpu_custom_call.1} parent=35 // pred_check
          %p227 = pneg %p73
        $region38: #{tpu_custom_call.1} parent=35 // pred_check_branch
          %229 = sbr.rel (%p227) target = $region40
        $region39: #{tpu_custom_call.1} parent=35 // pred_region
          %s230 = sand.u32 %s58, 1
          %s231 = scalar_lea.sflag [#allocation6], %s230
          %s232 = sand.u32 %s58, 1
          %s233 = smul.addr %s232, 8
          %s234 = scalar_lea.vmem [#allocation7], %s233
          %235 = dma.done %s231, 128
        $region40: #{tpu_custom_call.1} parent=35 // pred_fallthru
          _
      $region36: #{tpu_custom_call.1} parent=5 // pred_fallthru
        _
    $region6: #{tpu_custom_call.1} parent=1 // loop_footer
      %s22 = sadd.s32 1, %s18
    $region7: #{tpu_custom_call.1} parent=1 // loop_footer_branch
      %17 = sbr.rel target = $region3
    $region8: #{tpu_custom_call.1} parent=1 // loop_exit
      _
    %236 = vsyncpa [#allocation5], 1
    %s237 = scalar_lea.sflag [#allocation5], 1
    %238 = vsyncpa %s237, 1
    %239 = vsyncpa [#allocation6], 1
    %s240 = scalar_lea.sflag [#allocation6], 1
    %241 = vsyncpa %s240, 1

</llo_original>
